<compile_context>
chip_gen: v6e
topology: v6e:2x2x1
jax: 0.10.0
libtpu: 0.0.40
codegen_flags: <defaults>
</compile_context>

<pallas_src>
import functools

import jax
import jax.numpy as jnp
from jax.experimental import pallas as pl
from jax.experimental.pallas import tpu as pltpu

_EPS = 1e-5
_FLAT_WIDTHS = (512, 256, 128)      # lane-dense slab widths for elementwise paths
_MAX_BLOCK_BYTES = 4 * 1024 * 1024  # per-input block; 2-4 MiB hits the HBM roofline


def _round_up(x, m):
    return (x + m - 1) // m * m


def _cdiv(a, b):
    return (a + b - 1) // b


def _vmem_per_core_bytes():
    """Per-TensorCore VMEM capacity (v5e/v6e: 128 MiB, v7x: 64 MiB per TC)."""
    kind = ""
    try:
        kind = jax.devices()[0].device_kind.lower()
    except Exception:
        pass
    # v7x is the only supported generation with "7" in its device kind and has
    # 64 MiB per TensorCore (2 TCs/chip); earlier generations have 128 MiB.
    per_tc_ceiling = (64 if "7" in kind else 128) * 1024 * 1024
    try:
        cap = int(pltpu.get_tpu_info().vmem_capacity_bytes)
        if cap > 0:
            # get_tpu_info may report chip-level capacity; clamp to per-TC.
            return min(cap, per_tc_ceiling)
    except Exception:
        pass
    return per_tc_ceiling


def _pick_tile_rows(n_rows, width, itemsize, vmem_cap, n_f32_temps):
    """Largest row tile whose double-buffered pipeline + f32 temps fit VMEM."""
    if n_rows <= 8:
        return n_rows  # full row extent is always a legal block dim
    # 2 inputs x 2 pipeline buffers (native dtype) + live full-tile f32 temps.
    per_row = width * (2 * 2 * itemsize + n_f32_temps * 4)
    tm = int(vmem_cap * 0.5) // max(per_row, 1)
    # Keep each input block in the 2-4 MiB DMA sweet spot.
    tm = min(tm, _MAX_BLOCK_BYTES // max(width * itemsize, 1))
    # Keep >= ~4 grid steps so a v7x megacore "parallel" split never idles a TC.
    tm = min(tm, _round_up(_cdiv(n_rows, 4), 8))
    tm = max(8, (tm // 8) * 8)
    tm = min(tm, _round_up(n_rows, 8))
    return tm


def _recip(x):
    """EUP approximate reciprocal + one Newton step on the (slack) VALU."""
    r = pl.reciprocal(x, approx=True)
    return r * (2.0 - x * r)


def _dml_kernel(p1_ref, p2_ref, out_ref, *, act, use_log, valid_rows):
    """One row tile of the (unnormalized) DML loss.

    p1_ref, p2_ref : (TM, W) VMEM tiles (native dtype, cast to f32 here)
    out_ref        : (8, W) per-tile partial sums (f32, lane/sublane-dense)
                     or (TM, W) when TM < 8 (tiny inputs).
    valid_rows     : None (all rows valid) | int (rows >= valid_rows masked,
                     only ever needed on the last grid step).
    """
    tm, width = p1_ref.shape

    x1 = p1_ref[...].astype(jnp.float32)
    x2 = p2_ref[...].astype(jnp.float32)

    lg1 = lg2 = None
    if act == "softmax":
        m1 = jnp.max(x1, axis=-1, keepdims=True)
        m2 = jnp.max(x2, axis=-1, keepdims=True)
        u1 = x1 - m1
        u2 = x2 - m2
        e1 = jnp.exp(u1)
        e2 = jnp.exp(u2)
        s1 = jnp.sum(e1, axis=-1, keepdims=True)
        s2 = jnp.sum(e2, axis=-1, keepdims=True)
        q1 = e1 * _recip(s1)
        q2 = e2 * _recip(s2)
        if use_log:
            # log-softmax: 2 per-row logs instead of 2 full-tile logs.
            lg1 = u1 - jnp.log(s1)
            lg2 = u2 - jnp.log(s2)
    elif act == "sigmoid":
        q1 = jax.nn.sigmoid(x1)
        q2 = jax.nn.sigmoid(x2)
        if use_log:
            # log-sigmoid(x) = min(x, 0) - log(1 + exp(-|x|)): never log(0).
            lg1 = jnp.minimum(x1, 0.0) - jnp.log(1.0 + jnp.exp(-jnp.abs(x1)))
            lg2 = jnp.minimum(x2, 0.0) - jnp.log(1.0 + jnp.exp(-jnp.abs(x2)))
    else:
        q1, q2 = x1, x2
        if use_log:
            # Matches torch.log on raw probabilities exactly.
            lg1 = jnp.log(q1)
            lg2 = jnp.log(q2)

    if use_log:
        # q2*(lg2-lg1) + q1*(lg1-lg2) == (q2 - q1) * (lg2 - lg1)
        loss = (q2 - q1) * (lg2 - lg1)
    else:
        # KLJSLoss(mode='js') elementwise part; reciprocal+multiply instead of
        # two f32 divides (divide = recip + Newton on the EUP; we move the
        # Newton step to the VALU which has slack).
        a = q1 + _EPS
        b = q2 + _EPS
        ra = _recip(a)
        rb = _recip(b)
        loss = 0.5 * (q2 * jnp.log(b * ra + _EPS) + q1 * jnp.log(a * rb + _EPS))

    def _store(vals):
        if tm % 8 == 0:
            # Sublane-group partial sum: (tm, W) -> (8, W) with pure vreg adds
            # (no cross-lane XLU reduce), written lane/sublane-dense.
            out_ref[...] = vals.reshape(tm // 8, 8, width).sum(axis=0)
        else:
            out_ref[...] = vals

    if valid_rows is None:
        _store(loss)
    else:
        i = pl.program_id(0)
        last = pl.num_programs(0) - 1

        @pl.when(i != last)
        def _():
            _store(loss)

        @pl.when(i == last)
        def _():
            row_ids = jax.lax.broadcasted_iota(jnp.int32, (tm, width), 0) + i * tm
            _store(jnp.where(row_ids < valid_rows, loss, 0.0))


def dml_loss(out1, out2, act=None, use_log=False):
    """JAX/Pallas equivalent of DMLLoss(act, use_log).forward(out1, out2)."""
    assert act in (None, "softmax", "sigmoid")
    assert out1.shape == out2.shape
    batch = int(out1.shape[0])
    c = int(out1.shape[-1])
    rows = 1
    for d in out1.shape[:-1]:
        rows *= int(d)
    n_total = rows * c

    itemsize = jnp.dtype(out1.dtype).itemsize
    vmem_cap = _vmem_per_core_bytes()

    # Lane-dense 2-D presentation with NO jnp.pad (reshape is free/contiguous).
    width = None
    if act != "softmax":
        for w in _FLAT_WIDTHS:
            if n_total % w == 0:
                width = w
                break

    if width is not None:
        # Elementwise path: flatten into a lane-dense (rows2, width) slab.
        n_rows, n_cols = n_total // width, width
        n_temps = 8
    else:
        # Row-structured path (softmax needs the full class axis per row), or
        # elementwise fallback when the element count doesn't divide cleanly.
        # Last block dim == full C is always a legal BlockSpec.
        n_rows, n_cols = rows, c
        if act == "softmax":
            n_temps = 12 if use_log else 10
        else:
            n_temps = 8

    p1 = out1.reshape(n_rows, n_cols)
    p2 = out2.reshape(n_rows, n_cols)

    tm = _pick_tile_rows(n_rows, n_cols, itemsize, vmem_cap, n_temps)
    num_tiles = _cdiv(n_rows, tm)
    valid_rows = n_rows if (num_tiles * tm > n_rows) else None
    out_rows = 8 if tm % 8 == 0 else tm

    kernel = functools.partial(
        _dml_kernel, act=act, use_log=use_log, valid_rows=valid_rows)

    partials = pl.pallas_call(
        kernel,
        out_shape=jax.ShapeDtypeStruct((num_tiles * out_rows, n_cols), jnp.float32),
        grid_spec=pltpu.PrefetchScalarGridSpec(
            num_scalar_prefetch=0,
            grid=(num_tiles,),
            in_specs=[
                pl.BlockSpec((tm, n_cols), lambda i: (i, 0)),
                pl.BlockSpec((tm, n_cols), lambda i: (i, 0)),
            ],
            out_specs=pl.BlockSpec((out_rows, n_cols), lambda i: (i, 0)),
        ),
        compiler_params=pltpu.CompilerParams(
            dimension_semantics=("parallel",),
            vmem_limit_bytes=int(vmem_cap * 0.75),
        ),
    )(p1, p2)

    loss_sum = jnp.sum(partials)

    if use_log:
        # (kl_div(log p1, p2, batchmean) + kl_div(log p2, p1, batchmean)) / 2
        return loss_sum / (2.0 * batch)
    # KLJSLoss reduction='mean' -> mean over all elements
    return loss_sum / n_total


def _dml_loss_ref(out1, out2, act=None, use_log=False):
    """Pure-JAX reference mirroring the PyTorch semantics."""
    x1, x2 = out1.astype(jnp.float32), out2.astype(jnp.float32)
    if act == "softmax":
        x1, x2 = jax.nn.softmax(x1, axis=-1), jax.nn.softmax(x2, axis=-1)
    elif act == "sigmoid":
        x1, x2 = jax.nn.sigmoid(x1), jax.nn.sigmoid(x2)
    if use_log:
        kl12 = jnp.sum(x2 * (jnp.log(x2) - jnp.log(x1))) / x1.shape[0]
        kl21 = jnp.sum(x1 * (jnp.log(x1) - jnp.log(x2))) / x1.shape[0]
        return (kl12 + kl21) / 2.0
    l = x2 * jnp.log((x2 + _EPS) / (x1 + _EPS) + _EPS)
    l = l + x1 * jnp.log((x1 + _EPS) / (x2 + _EPS) + _EPS)
    return jnp.mean(0.5 * l)


def _check(name, got, want, rtol=1e-5, atol=1e-6):
    assert jnp.allclose(got, want, rtol=rtol, atol=atol), (name, got, want)


if __name__ == "__main__":
    key = jax.random.PRNGKey(0)
    k1, k2, k3, k4 = jax.random.split(key, 4)
    B, L, C = 2, 8, 32  # (batch, seq, classes)

    # Default DMLLoss(): act=None, use_log=False -> inputs are probabilities.
    p1 = jax.random.uniform(k1, (B, L, C), jnp.float32, minval=0.01, maxval=1.0)
    p2 = jax.random.uniform(k2, (B, L, C), jnp.float32, minval=0.01, maxval=1.0)
    _check("js_none",
           jax.block_until_ready(dml_loss(p1, p2, act=None, use_log=False)),
           _dml_loss_ref(p1, p2, act=None, use_log=False))

    # DMLLoss(act='softmax', use_log=True): inputs are raw logits.
    logits1 = jax.random.normal(k1, (B, L, C), jnp.float32)
    logits2 = jax.random.normal(k2, (B, L, C), jnp.float32)
    _check("kl_softmax",
           jax.block_until_ready(dml_loss(logits1, logits2, act="softmax", use_log=True)),
           _dml_loss_ref(logits1, logits2, act="softmax", use_log=True))

    # DMLLoss(act='sigmoid'): JS on sigmoid outputs.
    _check("js_sigmoid",
           jax.block_until_ready(dml_loss(logits1, logits2, act="sigmoid", use_log=False)),
           _dml_loss_ref(logits1, logits2, act="sigmoid", use_log=False))

    # DMLLoss(act='sigmoid', use_log=True): exercises the log-sigmoid path.
    _check("kl_sigmoid",
           jax.block_until_ready(dml_loss(logits1, logits2, act="sigmoid", use_log=True)),
           _dml_loss_ref(logits1, logits2, act="sigmoid", use_log=True))

    # Ragged shape (3, 7, 41): row path with lane-sparse C + last-tile row mask.
    l1 = jax.random.normal(k3, (3, 7, 41), jnp.float32)
    l2 = jax.random.normal(k4, (3, 7, 41), jnp.float32)
    _check("js_softmax_ragged",
           jax.block_until_ready(dml_loss(l1, l2, act="softmax", use_log=False)),
           _dml_loss_ref(l1, l2, act="softmax", use_log=False))

    # Flat path with a partial last row tile: (2, 36, 128), act=None, use_log.
    q1 = jax.random.uniform(k3, (2, 36, 128), jnp.float32, minval=0.01, maxval=1.0)
    q2 = jax.random.uniform(k4, (2, 36, 128), jnp.float32, minval=0.01, maxval=1.0)
    _check("kl_none_flat",
           jax.block_until_ready(dml_loss(q1, q2, act=None, use_log=True)),
           _dml_loss_ref(q1, q2, act=None, use_log=True))

    print("KERNEL_OK")
</pallas_src>

<mosaic_0001>
module attributes {stable_mosaic.version = 11 : i64} {
  func.func @_dml_kernel(%arg0: i32, %arg1: memref<1x512xf32, #tpu.memory_space<vmem>>, %arg2: memref<1x512xf32, #tpu.memory_space<vmem>>, %arg3: memref<1x512xf32, #tpu.memory_space<vmem>>) attributes {dimension_semantics = [#tpu.dimension_semantics<parallel>], iteration_bounds = array<i64: 1>, scalar_prefetch = 0 : i64, scratch_operands = 0 : i64, tpu.core_type = #tpu.core_type<tc>, window_params = [{transform_indices = @transform_0, window_bounds = array<i64: 1, 512>}, {transform_indices = @transform_1, window_bounds = array<i64: 1, 512>}, {transform_indices = @transform_2, window_bounds = array<i64: 1, 512>}]} {
    %c0 = arith.constant 0 : index
    %c0_0 = arith.constant 0 : index
    %0 = vector.load %arg1[%c0, %c0_0] : memref<1x512xf32, #tpu.memory_space<vmem>>, vector<1x512xf32>
    %c0_1 = arith.constant 0 : index
    %c0_2 = arith.constant 0 : index
    %1 = vector.load %arg2[%c0_1, %c0_2] : memref<1x512xf32, #tpu.memory_space<vmem>>, vector<1x512xf32>
    %cst = arith.constant 9.99999974E-6 : f32
    %2 = vector.broadcast %cst : f32 to vector<1x512xf32>
    %3 = arith.addf %0, %2 : vector<1x512xf32>
    %cst_3 = arith.constant 9.99999974E-6 : f32
    %4 = vector.broadcast %cst_3 : f32 to vector<1x512xf32>
    %5 = arith.addf %1, %4 : vector<1x512xf32>
    %6 = tpu.reciprocal %3 {approx = true} : vector<1x512xf32> -> vector<1x512xf32>
    %7 = arith.mulf %3, %6 : vector<1x512xf32>
    %cst_4 = arith.constant 2.000000e+00 : f32
    %8 = vector.broadcast %cst_4 : f32 to vector<1x512xf32>
    %9 = arith.subf %8, %7 : vector<1x512xf32>
    %10 = arith.mulf %6, %9 : vector<1x512xf32>
    %11 = tpu.reciprocal %5 {approx = true} : vector<1x512xf32> -> vector<1x512xf32>
    %12 = arith.mulf %5, %11 : vector<1x512xf32>
    %cst_5 = arith.constant 2.000000e+00 : f32
    %13 = vector.broadcast %cst_5 : f32 to vector<1x512xf32>
    %14 = arith.subf %13, %12 : vector<1x512xf32>
    %15 = arith.mulf %11, %14 : vector<1x512xf32>
    %16 = arith.mulf %5, %10 : vector<1x512xf32>
    %cst_6 = arith.constant 9.99999974E-6 : f32
    %17 = vector.broadcast %cst_6 : f32 to vector<1x512xf32>
    %18 = arith.addf %16, %17 : vector<1x512xf32>
    %19 = math.log %18 : vector<1x512xf32>
    %20 = arith.mulf %1, %19 : vector<1x512xf32>
    %21 = arith.mulf %3, %15 : vector<1x512xf32>
    %cst_7 = arith.constant 9.99999974E-6 : f32
    %22 = vector.broadcast %cst_7 : f32 to vector<1x512xf32>
    %23 = arith.addf %21, %22 : vector<1x512xf32>
    %24 = math.log %23 : vector<1x512xf32>
    %25 = arith.mulf %0, %24 : vector<1x512xf32>
    %26 = arith.addf %20, %25 : vector<1x512xf32>
    %cst_8 = arith.constant 5.000000e-01 : f32
    %27 = vector.broadcast %cst_8 : f32 to vector<1x512xf32>
    %28 = arith.mulf %27, %26 : vector<1x512xf32>
    %c0_9 = arith.constant 0 : index
    %c0_10 = arith.constant 0 : index
    %29 = vector.load %arg3[%c0_9, %c0_10] : memref<1x512xf32, #tpu.memory_space<vmem>>, vector<1x512xf32>
    tpu.vector_store %arg3[%c0_9, %c0_10], %28 {strides = array<i32>} : memref<1x512xf32, #tpu.memory_space<vmem>>, vector<1x512xf32>,
    return
  }
  func.func @transform_0(%arg0: i32) -> (i32, i32) {
    %c0_i32 = arith.constant 0 : i32
    %c0_i32_0 = arith.constant 0 : i32
    return %arg0, %c0_i32 : i32, i32
  }
  func.func @transform_1(%arg0: i32) -> (i32, i32) {
    %c0_i32 = arith.constant 0 : i32
    %c0_i32_0 = arith.constant 0 : i32
    return %arg0, %c0_i32 : i32, i32
  }
  func.func @transform_2(%arg0: i32) -> (i32, i32) {
    %c0_i32 = arith.constant 0 : i32
    %c0_i32_0 = arith.constant 0 : i32
    return %arg0, %c0_i32 : i32, i32
  }
}

</mosaic_0001>

<llo_original>
// kernel: tpu_custom_call.1
$region0: #{tpu_custom_call.1}
  #allocation0 [shape = 'u32[]', space=smem, size = 0x4, offset = 0x4, fixed_abs, tag = 'smem constant byte address 0x4 - core index']
  #allocation1 [shape = 'u32[144,128]{1,0:T(1,128)}', space=vmem, size = 0x12000, scoped, tag = 'internal scratch']
  %s0 = inlined_call_operand.hbm [shape: f32[1,512], index: 0, kind: input, shape index: {}]
  %s1 = inlined_call_operand.hbm [shape: f32[1,512], index: 1, kind: input, shape index: {}]
  %s2 = inlined_call_operand.hbm [shape: f32[1,512], index: 2, kind: output, shape index: {}]
  %s3 = sld [smem:[#allocation0]]
  $region26: #{tpu_custom_call.1} parent=0
    _
  %s5 = ssub.s32 1, %s3
  %s6 = scalar_select 0, %s5, %s3
  $region1: #{tpu_custom_call.1} parent=0
    #allocation2 [shape = 'u8[2048]{0}', space=vmem, size = 0x800, scoped, tag = 'input window, operand 0, single buffered']
    #allocation3 [shape = 's32[1]{0}', space=sflag, size = 0x4, scoped, tag = 'scoped memory for tpu_custom_call.1']
    #allocation4 [shape = 's32[1]{0}', space=sflag, size = 0x4, scoped, tag = 'scoped memory for tpu_custom_call.1']
    #allocation5 [shape = 'u8[2048]{0}', space=vmem, size = 0x800, scoped, tag = 'input window, operand 1, single buffered']
    #allocation6 [shape = 's32[1]{0}', space=sflag, size = 0x4, scoped, tag = 'scoped memory for tpu_custom_call.1']
    #allocation7 [shape = 'u8[2048]{0}', space=vmem, size = 0x800, scoped, tag = 'output window, operand 0, single buffered']
    %7 = vsyncpa [#allocation3], 0
    %8 = vsyncpa [#allocation6], 0
    %9 = vsyncpa [#allocation4], 0
    // Predicated region
    $region2: #{tpu_custom_call.1} parent=1 // pred_check
      _
    $region3: #{tpu_custom_call.1} parent=1 // pred_check_branch
      %11 = sbr.rel (0) target = $region5
    $region4: #{tpu_custom_call.1} parent=1 // pred_region
      %s13 = ssub.s32 64, 64
      %14 = vsyncadd [#allocation3], %s13
      %s16 = sshll.u32 [#allocation2], 4
      %s17 = int_to_ptr.vmem [resolvable:$true] %s16
      %19 = dma.hbm_to_vmem [thread:$0]  %s0, 64, %s17, [#allocation3]
    $region5: #{tpu_custom_call.1} parent=1 // pred_fallthru
      _
    // Predicated region
    $region6: #{tpu_custom_call.1} parent=1 // pred_check
      _
    $region7: #{tpu_custom_call.1} parent=1 // pred_check_branch
      %21 = sbr.rel (0) target = $region9
    $region8: #{tpu_custom_call.1} parent=1 // pred_region
      %s23 = ssub.s32 64, 64
      %24 = vsyncadd [#allocation6], %s23
      %s26 = sshll.u32 [#allocation5], 4
      %s27 = int_to_ptr.vmem [resolvable:$true] %s26
      %29 = dma.hbm_to_vmem [thread:$0]  %s1, 64, %s27, [#allocation6]
    $region9: #{tpu_custom_call.1} parent=1 // pred_fallthru
      _
    // Predicated region
    $region10: #{tpu_custom_call.1} parent=1 // pred_check
      _
    $region11: #{tpu_custom_call.1} parent=1 // pred_check_branch
      %31 = sbr.rel (0) target = $region13
    $region12: #{tpu_custom_call.1} parent=1 // pred_region
      %32 = dma.done [#allocation3], 64
    $region13: #{tpu_custom_call.1} parent=1 // pred_fallthru
      _
    // Predicated region
    $region14: #{tpu_custom_call.1} parent=1 // pred_check
      _
    $region15: #{tpu_custom_call.1} parent=1 // pred_check_branch
      %34 = sbr.rel (0) target = $region17
    $region16: #{tpu_custom_call.1} parent=1 // pred_region
      %35 = dma.done [#allocation6], 64
    $region17: #{tpu_custom_call.1} parent=1 // pred_fallthru
      _
    %v36 = vld [vmem:[#allocation2] sm:$0xf]
    %v37 = vld [vmem:[#allocation5] sm:$0xf]
    %v38 = vadd.f32 %v36, 1e-05
    %v39 = vadd.f32 %v37, 1e-05
    %v40 = vrcp.pop %v38
    %v41 = vmul.f32 %v38, %v40
    %v42 = vsub.f32 2.0, %v41
    %v43 = vmul.f32 %v40, %v42
    %v44 = vrcp.pop %v39
    %v45 = vmul.f32 %v39, %v44
    %v46 = vsub.f32 2.0, %v45
    %v47 = vmul.f32 %v44, %v46
    %v48 = vmul.f32 %v39, %v43
    %v49 = vadd.f32 %v48, 1e-05
    %v50 = vlog2.pop %v49
    %v51 = vmul.f32 %v50, 0.6931472
    %v52 = vmul.f32 %v37, %v51
    %v53 = vmul.f32 %v38, %v47
    %v54 = vadd.f32 %v53, 1e-05
    %v55 = vlog2.pop %v54
    %v56 = vmul.f32 %v55, 0.6931472
    %v57 = vmul.f32 %v36, %v56
    %v58 = vadd.f32 %v52, %v57
    %v59 = vmul.f32 %v58, 0.5
    %v60 = vlaneseq
    %vm61 = vcmp.ge.s32.totalorder %v60, 0
    %vm62 = vcmp.lt.s32.totalorder %v60, 512
    %vm63 = vmand %vm61, %vm62
    %64 = vst.msk [vmem:[#allocation7] sm:$0xf] %vm63, %v59
    // Predicated region
    $region18: #{tpu_custom_call.1} parent=1 // pred_check
      _
    $region19: #{tpu_custom_call.1} parent=1 // pred_check_branch
      %66 = sbr.rel (0) target = $region21
    $region20: #{tpu_custom_call.1} parent=1 // pred_region
      %s68 = ssub.s32 64, 64
      %69 = vsyncadd [#allocation4], %s68
      %s71 = sshll.u32 [#allocation7], 4
      %s72 = int_to_ptr.vmem [resolvable:$true] %s71
      %74 = dma.vmem_to_hbm [thread:$0]  %s72, 64, %s2, [#allocation4]
    $region21: #{tpu_custom_call.1} parent=1 // pred_fallthru
      _
    // Predicated region
    $region22: #{tpu_custom_call.1} parent=1 // pred_check
      _
    $region23: #{tpu_custom_call.1} parent=1 // pred_check_branch
      %76 = sbr.rel (0) target = $region25
    $region24: #{tpu_custom_call.1} parent=1 // pred_region
      %77 = dma.done [#allocation4], 64
    $region25: #{tpu_custom_call.1} parent=1 // pred_fallthru
      _
    %78 = vsyncpa [#allocation3], 1
    %79 = vsyncpa [#allocation6], 1
    %80 = vsyncpa [#allocation4], 1

</llo_original>
